<compile_context>
chip_gen: v7x
topology: tpu7x:2x2x1
jax: 0.10.0
libtpu: 0.0.40
codegen_flags: <defaults>
</compile_context>

<pallas_src>
import jax
import jax.numpy as jnp
from jax.experimental import pallas as pl
from jax.experimental.pallas import tpu as pltpu  # noqa: F401  (kept for parity / future DMA variant)


def _swap_c1_c2_kernel(x_ref, o_ref):
    # x_ref: (C1, C2, HW)  -- input with C1 leading
    # o_ref: (C2, C1*HW)   -- output viewed lane-dense: element (c2, c1*HW+hw)
    # The dim-1/2 swap becomes two lane-range stores of full (C2, HW) slabs.
    c1, _, hw = x_ref.shape
    for i in range(c1):  # C1 == 2: static Python loop, fully unrolled
        o_ref[:, i * hw:(i + 1) * hw] = x_ref[i]


def transpose_1_2(x):
    """Pallas equivalent of torch.transpose(x, 1, 2) for a 5-D tensor."""
    N, C1, C2, H, W = x.shape
    assert N == 1  # module spec has batch 1; TODO(synk): add a grid over N>1
    HW = H * W

    # Contiguous-trailing-dim reshape: free (no data movement).
    x3 = x.reshape(C1, C2, HW)

    bytes_accessed = 2 * x.size * x.dtype.itemsize  # one read + one write

    out2d = pl.pallas_call(
        _swap_c1_c2_kernel,
        out_shape=jax.ShapeDtypeStruct((C2, C1 * HW), x.dtype),
        # No grid: single invocation, whole tensor resident in VMEM.
        in_specs=[pl.BlockSpec((C1, C2, HW), lambda: (0, 0, 0))],
        out_specs=pl.BlockSpec((C2, C1 * HW), lambda: (0, 0)),
        cost_estimate=pl.CostEstimate(
            flops=0, transcendentals=0, bytes_accessed=bytes_accessed
        ),
    )(x3)

    # Free reshape back to the 5-D transposed shape (N, C2, C1, H, W).
    return out2d.reshape(N, C2, C1, H, W)


if __name__ == "__main__":
    key = jax.random.PRNGKey(0)
    # Shape implied by the module: torch.Size([1, 2, 244, 14, 14]) (~374 KiB).
    x181 = jax.random.normal(key, (1, 2, 244, 14, 14), dtype=jnp.float32)

    x182 = transpose_1_2(x181)
    x182 = jax.block_until_ready(x182)

    # Reference check against plain JAX swapaxes (semantics of torch.transpose).
    ref = jnp.swapaxes(x181, 1, 2)
    assert x182.shape == (1, 244, 2, 14, 14), x182.shape
    assert x182.dtype == x181.dtype
    assert jnp.array_equal(x182, ref), "mismatch vs reference transpose"

    print("KERNEL_OK")
</pallas_src>

<mosaic_0001>
module attributes {stable_mosaic.version = 11 : i64} {
  func.func @_swap_c1_c2_kernel(%arg0: memref<2x244x196xf32, #tpu.memory_space<vmem>>, %arg1: memref<244x392xf32, #tpu.memory_space<vmem>>) attributes {dimension_semantics = [], scalar_prefetch = 0 : i64, scratch_operands = 0 : i64, tpu.core_type = #tpu.core_type<tc>} {
    %c0 = arith.constant 0 : index
    %c0_0 = arith.constant 0 : index
    %c0_1 = arith.constant 0 : index
    %0 = vector.load %arg0[%c0, %c0_0, %c0_1] : memref<2x244x196xf32, #tpu.memory_space<vmem>>, vector<1x244x196xf32>
    %1 = vector.shape_cast %0 : vector<1x244x196xf32> to vector<244x196xf32>
    %c0_2 = arith.constant 0 : index
    %c0_3 = arith.constant 0 : index
    %2 = vector.load %arg1[%c0_2, %c0_3] : memref<244x392xf32, #tpu.memory_space<vmem>>, vector<244x196xf32>
    tpu.vector_store %arg1[%c0_2, %c0_3], %1 {strides = array<i32>} : memref<244x392xf32, #tpu.memory_space<vmem>>, vector<244x196xf32>,
    %c1 = arith.constant 1 : index
    %c0_4 = arith.constant 0 : index
    %c0_5 = arith.constant 0 : index
    %3 = vector.load %arg0[%c1, %c0_4, %c0_5] : memref<2x244x196xf32, #tpu.memory_space<vmem>>, vector<1x244x196xf32>
    %4 = vector.shape_cast %3 : vector<1x244x196xf32> to vector<244x196xf32>
    %c0_6 = arith.constant 0 : index
    %c196 = arith.constant 196 : index
    %5 = vector.load %arg1[%c0_6, %c196] : memref<244x392xf32, #tpu.memory_space<vmem>>, vector<244x196xf32>
    tpu.vector_store %arg1[%c0_6, %c196], %4 {strides = array<i32>} : memref<244x392xf32, #tpu.memory_space<vmem>>, vector<244x196xf32>,
    return
  }
}

</mosaic_0001>

<llo_original>
// kernel: tpu_custom_call.1
$region0: #{tpu_custom_call.1}
  #allocation0 [shape = 'u32[]', space=smem, size = 0x4, offset = 0x4, fixed_abs, tag = 'smem constant byte address 0x4 - core index']
  #allocation1 [shape = 'u32[144,128]{1,0:T(1,128)}', space=vmem, size = 0x12000, scoped, tag = 'internal scratch']
  %s0 = inlined_call_operand.vmem [shape: f32[2,244,196], index: 0, kind: input, shape index: {}]
  %s1 = inlined_call_operand.vmem [shape: f32[244,392], index: 1, kind: output, shape index: {}]
  %s2 = sld [smem:[#allocation0]]
  $region14: #{tpu_custom_call.1} parent=0
    _
  %s4 = ssub.s32 1, %s2
  %s5 = scalar_select 0, %s4, %s2
  // Predicated region
  $region2: #{tpu_custom_call.1} parent=0 // pred_check
    _
  $region3: #{tpu_custom_call.1} parent=0 // pred_check_branch
    %7 = sbr.rel (0) target = $region5
  $region4: #{tpu_custom_call.1} parent=0 // pred_region
    _
  $region5: #{tpu_custom_call.1} parent=0 // pred_fallthru
    _
  %v8 = vld [vmem:[%s0] sm:$0xff]
  %v9 = vld [vmem:[%s0 + $0x8] sm:$0xff]
  %v10 = vld [vmem:[%s0 + $0x10] sm:$0xff]
  %v11 = vld [vmem:[%s0 + $0x18] sm:$0xff]
  %v12 = vld [vmem:[%s0 + $0x20] sm:$0xff]
  %v13 = vld [vmem:[%s0 + $0x28] sm:$0xff]
  %v14 = vld [vmem:[%s0 + $0x30] sm:$0xff]
  %v15 = vld [vmem:[%s0 + $0x38] sm:$0xff]
  %v16 = vld [vmem:[%s0 + $0x40] sm:$0xff]
  %v17 = vld [vmem:[%s0 + $0x48] sm:$0xff]
  %v18 = vld [vmem:[%s0 + $0x50] sm:$0xff]
  %v19 = vld [vmem:[%s0 + $0x58] sm:$0xff]
  %v20 = vld [vmem:[%s0 + $0x60] sm:$0xff]
  %v21 = vld [vmem:[%s0 + $0x68] sm:$0xff]
  %v22 = vld [vmem:[%s0 + $0x70] sm:$0xff]
  %v23 = vld [vmem:[%s0 + $0x78] sm:$0xff]
  %v24 = vld [vmem:[%s0 + $0x80] sm:$0xff]
  %v25 = vld [vmem:[%s0 + $0x88] sm:$0xff]
  %v26 = vld [vmem:[%s0 + $0x90] sm:$0xff]
  %v27 = vld [vmem:[%s0 + $0x98] sm:$0xff]
  %v28 = vld [vmem:[%s0 + $0xa0] sm:$0xff]
  %v29 = vld [vmem:[%s0 + $0xa8] sm:$0xff]
  %v30 = vld [vmem:[%s0 + $0xb0] sm:$0xff]
  %v31 = vld [vmem:[%s0 + $0xb8] sm:$0xff]
  %v32 = vld [vmem:[%s0 + $0xc0] sm:$0xff]
  %v33 = vld [vmem:[%s0 + $0xc8] sm:$0xff]
  %v34 = vld [vmem:[%s0 + $0xd0] sm:$0xff]
  %v35 = vld [vmem:[%s0 + $0xd8] sm:$0xff]
  %v36 = vld [vmem:[%s0 + $0xe0] sm:$0xff]
  %v37 = vld [vmem:[%s0 + $0xe8] sm:$0xff]
  %v38 = vld [vmem:[%s0 + $0xf0] sm:$0xff]
  %v39 = vld [vmem:[%s0 + $0xf8] sm:$0xff]
  %v40 = vld [vmem:[%s0 + $0x100] sm:$0xff]
  %v41 = vld [vmem:[%s0 + $0x108] sm:$0xff]
  %v42 = vld [vmem:[%s0 + $0x110] sm:$0xff]
  %v43 = vld [vmem:[%s0 + $0x118] sm:$0xff]
  %v44 = vld [vmem:[%s0 + $0x120] sm:$0xff]
  %v45 = vld [vmem:[%s0 + $0x128] sm:$0xff]
  %v46 = vld [vmem:[%s0 + $0x130] sm:$0xff]
  %v47 = vld [vmem:[%s0 + $0x138] sm:$0xff]
  %v48 = vld [vmem:[%s0 + $0x140] sm:$0xff]
  %v49 = vld [vmem:[%s0 + $0x148] sm:$0xff]
  %v50 = vld [vmem:[%s0 + $0x150] sm:$0xff]
  %v51 = vld [vmem:[%s0 + $0x158] sm:$0xff]
  %v52 = vld [vmem:[%s0 + $0x160] sm:$0xff]
  %v53 = vld [vmem:[%s0 + $0x168] sm:$0xff]
  %v54 = vld [vmem:[%s0 + $0x170] sm:$0xff]
  %v55 = vld [vmem:[%s0 + $0x178] sm:$0xff]
  %v56 = vld [vmem:[%s0 + $0x180] sm:$0xff]
  %v57 = vld [vmem:[%s0 + $0x188] sm:$0xff]
  %v58 = vld [vmem:[%s0 + $0x190] sm:$0xff]
  %v59 = vld [vmem:[%s0 + $0x198] sm:$0xff]
  %v60 = vld [vmem:[%s0 + $0x1a0] sm:$0xff]
  %v61 = vld [vmem:[%s0 + $0x1a8] sm:$0xff]
  %v62 = vld [vmem:[%s0 + $0x1b0] sm:$0xff]
  %v63 = vld [vmem:[%s0 + $0x1b8] sm:$0xff]
  %v64 = vld [vmem:[%s0 + $0x1c0] sm:$0xff]
  %v65 = vld [vmem:[%s0 + $0x1c8] sm:$0xff]
  %v66 = vld [vmem:[%s0 + $0x1d0] sm:$0xff]
  %v67 = vld [vmem:[%s0 + $0x1d8] sm:$0xff]
  %v68 = vld [vmem:[%s0 + $0x1e0] sm:$0xf]
  %v69 = vld [vmem:[%s0 + $0x1e8] sm:$0xf]
  %70 = vst [vmem:[%s1] sm:$0xff] %v8
  %vm71 = vcmask 556032
  %72 = vst.msk [vmem:[%s1 + $0x8] sm:$0xff] %vm71, %v9
  %73 = vst [vmem:[%s1 + $0x20] sm:$0xff] %v10
  %74 = vst.msk [vmem:[%s1 + $0x28] sm:$0xff] %vm71, %v11
  %75 = vst [vmem:[%s1 + $0x40] sm:$0xff] %v12
  %76 = vst.msk [vmem:[%s1 + $0x48] sm:$0xff] %vm71, %v13
  %77 = vst [vmem:[%s1 + $0x60] sm:$0xff] %v14
  %78 = vst.msk [vmem:[%s1 + $0x68] sm:$0xff] %vm71, %v15
  %79 = vst [vmem:[%s1 + $0x80] sm:$0xff] %v16
  %80 = vst.msk [vmem:[%s1 + $0x88] sm:$0xff] %vm71, %v17
  %81 = vst [vmem:[%s1 + $0xa0] sm:$0xff] %v18
  %82 = vst.msk [vmem:[%s1 + $0xa8] sm:$0xff] %vm71, %v19
  %83 = vst [vmem:[%s1 + $0xc0] sm:$0xff] %v20
  %84 = vst.msk [vmem:[%s1 + $0xc8] sm:$0xff] %vm71, %v21
  %85 = vst [vmem:[%s1 + $0xe0] sm:$0xff] %v22
  %86 = vst.msk [vmem:[%s1 + $0xe8] sm:$0xff] %vm71, %v23
  %87 = vst [vmem:[%s1 + $0x100] sm:$0xff] %v24
  %88 = vst.msk [vmem:[%s1 + $0x108] sm:$0xff] %vm71, %v25
  %89 = vst [vmem:[%s1 + $0x120] sm:$0xff] %v26
  %90 = vst.msk [vmem:[%s1 + $0x128] sm:$0xff] %vm71, %v27
  %91 = vst [vmem:[%s1 + $0x140] sm:$0xff] %v28
  %92 = vst.msk [vmem:[%s1 + $0x148] sm:$0xff] %vm71, %v29
  %93 = vst [vmem:[%s1 + $0x160] sm:$0xff] %v30
  %94 = vst.msk [vmem:[%s1 + $0x168] sm:$0xff] %vm71, %v31
  %95 = vst [vmem:[%s1 + $0x180] sm:$0xff] %v32
  %96 = vst.msk [vmem:[%s1 + $0x188] sm:$0xff] %vm71, %v33
  %97 = vst [vmem:[%s1 + $0x1a0] sm:$0xff] %v34
  %98 = vst.msk [vmem:[%s1 + $0x1a8] sm:$0xff] %vm71, %v35
  %99 = vst [vmem:[%s1 + $0x1c0] sm:$0xff] %v36
  %100 = vst.msk [vmem:[%s1 + $0x1c8] sm:$0xff] %vm71, %v37
  %101 = vst [vmem:[%s1 + $0x1e0] sm:$0xff] %v38
  %102 = vst.msk [vmem:[%s1 + $0x1e8] sm:$0xff] %vm71, %v39
  %103 = vst [vmem:[%s1 + $0x200] sm:$0xff] %v40
  %104 = vst.msk [vmem:[%s1 + $0x208] sm:$0xff] %vm71, %v41
  %105 = vst [vmem:[%s1 + $0x220] sm:$0xff] %v42
  %106 = vst.msk [vmem:[%s1 + $0x228] sm:$0xff] %vm71, %v43
  %107 = vst [vmem:[%s1 + $0x240] sm:$0xff] %v44
  %108 = vst.msk [vmem:[%s1 + $0x248] sm:$0xff] %vm71, %v45
  %109 = vst [vmem:[%s1 + $0x260] sm:$0xff] %v46
  %110 = vst.msk [vmem:[%s1 + $0x268] sm:$0xff] %vm71, %v47
  %111 = vst [vmem:[%s1 + $0x280] sm:$0xff] %v48
  %112 = vst.msk [vmem:[%s1 + $0x288] sm:$0xff] %vm71, %v49
  %113 = vst [vmem:[%s1 + $0x2a0] sm:$0xff] %v50
  %114 = vst.msk [vmem:[%s1 + $0x2a8] sm:$0xff] %vm71, %v51
  %115 = vst [vmem:[%s1 + $0x2c0] sm:$0xff] %v52
  %116 = vst.msk [vmem:[%s1 + $0x2c8] sm:$0xff] %vm71, %v53
  %117 = vst [vmem:[%s1 + $0x2e0] sm:$0xff] %v54
  %118 = vst.msk [vmem:[%s1 + $0x2e8] sm:$0xff] %vm71, %v55
  %119 = vst [vmem:[%s1 + $0x300] sm:$0xff] %v56
  %120 = vst.msk [vmem:[%s1 + $0x308] sm:$0xff] %vm71, %v57
  %121 = vst [vmem:[%s1 + $0x320] sm:$0xff] %v58
  %122 = vst.msk [vmem:[%s1 + $0x328] sm:$0xff] %vm71, %v59
  %123 = vst [vmem:[%s1 + $0x340] sm:$0xff] %v60
  %124 = vst.msk [vmem:[%s1 + $0x348] sm:$0xff] %vm71, %v61
  %125 = vst [vmem:[%s1 + $0x360] sm:$0xff] %v62
  %126 = vst.msk [vmem:[%s1 + $0x368] sm:$0xff] %vm71, %v63
  %127 = vst [vmem:[%s1 + $0x380] sm:$0xff] %v64
  %128 = vst.msk [vmem:[%s1 + $0x388] sm:$0xff] %vm71, %v65
  %129 = vst [vmem:[%s1 + $0x3a0] sm:$0xff] %v66
  %130 = vst.msk [vmem:[%s1 + $0x3a8] sm:$0xff] %vm71, %v67
  %131 = vst [vmem:[%s1 + $0x3c0] sm:$0xf] %v68
  %vm132 = vcmask 551936
  %133 = vst.msk [vmem:[%s1 + $0x3c8] sm:$0xf] %vm132, %v69
  %s134 = scalar_lea.vmem %s0, 496
  %v135 = vld [vmem:[%s134] sm:$0xff]
  %v136 = vld [vmem:[%s134 + $0x8] sm:$0xff]
  %v137 = vld [vmem:[%s134 + $0x10] sm:$0xff]
  %v138 = vld [vmem:[%s134 + $0x18] sm:$0xff]
  %v139 = vld [vmem:[%s134 + $0x20] sm:$0xff]
  %v140 = vld [vmem:[%s134 + $0x28] sm:$0xff]
  %v141 = vld [vmem:[%s134 + $0x30] sm:$0xff]
  %v142 = vld [vmem:[%s134 + $0x38] sm:$0xff]
  %v143 = vld [vmem:[%s134 + $0x40] sm:$0xff]
  %v144 = vld [vmem:[%s134 + $0x48] sm:$0xff]
  %v145 = vld [vmem:[%s134 + $0x50] sm:$0xff]
  %v146 = vld [vmem:[%s134 + $0x58] sm:$0xff]
  %v147 = vld [vmem:[%s134 + $0x60] sm:$0xff]
  %v148 = vld [vmem:[%s134 + $0x68] sm:$0xff]
  %v149 = vld [vmem:[%s134 + $0x70] sm:$0xff]
  %v150 = vld [vmem:[%s134 + $0x78] sm:$0xff]
  %v151 = vld [vmem:[%s134 + $0x80] sm:$0xff]
  %v152 = vld [vmem:[%s134 + $0x88] sm:$0xff]
  %v153 = vld [vmem:[%s134 + $0x90] sm:$0xff]
  %v154 = vld [vmem:[%s134 + $0x98] sm:$0xff]
  %v155 = vld [vmem:[%s134 + $0xa0] sm:$0xff]
  %v156 = vld [vmem:[%s134 + $0xa8] sm:$0xff]
  %v157 = vld [vmem:[%s134 + $0xb0] sm:$0xff]
  %v158 = vld [vmem:[%s134 + $0xb8] sm:$0xff]
  %v159 = vld [vmem:[%s134 + $0xc0] sm:$0xff]
  %v160 = vld [vmem:[%s134 + $0xc8] sm:$0xff]
  %v161 = vld [vmem:[%s134 + $0xd0] sm:$0xff]
  %v162 = vld [vmem:[%s134 + $0xd8] sm:$0xff]
  %v163 = vld [vmem:[%s134 + $0xe0] sm:$0xff]
  %v164 = vld [vmem:[%s134 + $0xe8] sm:$0xff]
  %v165 = vld [vmem:[%s134 + $0xf0] sm:$0xff]
  %v166 = vld [vmem:[%s134 + $0xf8] sm:$0xff]
  %v167 = vld [vmem:[%s134 + $0x100] sm:$0xff]
  %v168 = vld [vmem:[%s134 + $0x108] sm:$0xff]
  %v169 = vld [vmem:[%s134 + $0x110] sm:$0xff]
  %v170 = vld [vmem:[%s134 + $0x118] sm:$0xff]
  %v171 = vld [vmem:[%s134 + $0x120] sm:$0xff]
  %v172 = vld [vmem:[%s134 + $0x128] sm:$0xff]
  %v173 = vld [vmem:[%s134 + $0x130] sm:$0xff]
  %v174 = vld [vmem:[%s134 + $0x138] sm:$0xff]
  %v175 = vld [vmem:[%s134 + $0x140] sm:$0xff]
  %v176 = vld [vmem:[%s134 + $0x148] sm:$0xff]
  %v177 = vld [vmem:[%s134 + $0x150] sm:$0xff]
  %v178 = vld [vmem:[%s134 + $0x158] sm:$0xff]
  %v179 = vld [vmem:[%s134 + $0x160] sm:$0xff]
  %v180 = vld [vmem:[%s134 + $0x168] sm:$0xff]
  %v181 = vld [vmem:[%s134 + $0x170] sm:$0xff]
  %v182 = vld [vmem:[%s134 + $0x178] sm:$0xff]
  %v183 = vld [vmem:[%s134 + $0x180] sm:$0xff]
  %v184 = vld [vmem:[%s134 + $0x188] sm:$0xff]
  %v185 = vld [vmem:[%s134 + $0x190] sm:$0xff]
  %v186 = vld [vmem:[%s134 + $0x198] sm:$0xff]
  %v187 = vld [vmem:[%s134 + $0x1a0] sm:$0xff]
  %v188 = vld [vmem:[%s134 + $0x1a8] sm:$0xff]
  %v189 = vld [vmem:[%s134 + $0x1b0] sm:$0xff]
  %v190 = vld [vmem:[%s134 + $0x1b8] sm:$0xff]
  %v191 = vld [vmem:[%s134 + $0x1c0] sm:$0xff]
  %v192 = vld [vmem:[%s134 + $0x1c8] sm:$0xff]
  %v193 = vld [vmem:[%s134 + $0x1d0] sm:$0xff]
  %v194 = vld [vmem:[%s134 + $0x1d8] sm:$0xff]
  %v195 = vld [vmem:[%s134 + $0x1e0] sm:$0xf]
  %v196 = vld [vmem:[%s134 + $0x1e8] sm:$0xf]
  %259 = vrot.lane.b32.xlu0 %v135, 68
  %v260 = vpop.permute.xlu0 %259
  %261 = vrot.lane.b32.xlu0 %v136, 68
  %v262 = vpop.permute.xlu0 %261
  %263 = vrot.lane.b32.xlu0 %v137, 68
  %v264 = vpop.permute.xlu0 %263
  %265 = vrot.lane.b32.xlu0 %v138, 68
  %v266 = vpop.permute.xlu0 %265
  %267 = vrot.lane.b32.xlu0 %v139, 68
  %v268 = vpop.permute.xlu0 %267
  %269 = vrot.lane.b32.xlu0 %v140, 68
  %v270 = vpop.permute.xlu0 %269
  %271 = vrot.lane.b32.xlu0 %v141, 68
  %v272 = vpop.permute.xlu0 %271
  %273 = vrot.lane.b32.xlu0 %v142, 68
  %v274 = vpop.permute.xlu0 %273
  %275 = vrot.lane.b32.xlu0 %v143, 68
  %v276 = vpop.permute.xlu0 %275
  %277 = vrot.lane.b32.xlu0 %v144, 68
  %v278 = vpop.permute.xlu0 %277
  %279 = vrot.lane.b32.xlu0 %v145, 68
  %v280 = vpop.permute.xlu0 %279
  %281 = vrot.lane.b32.xlu0 %v146, 68
  %v282 = vpop.permute.xlu0 %281
  %283 = vrot.lane.b32.xlu0 %v147, 68
  %v284 = vpop.permute.xlu0 %283
  %285 = vrot.lane.b32.xlu0 %v148, 68
  %v286 = vpop.permute.xlu0 %285
  %287 = vrot.lane.b32.xlu0 %v149, 68
  %v288 = vpop.permute.xlu0 %287
  %289 = vrot.lane.b32.xlu0 %v150, 68
  %v290 = vpop.permute.xlu0 %289
  %291 = vrot.lane.b32.xlu0 %v151, 68
  %v292 = vpop.permute.xlu0 %291
  %293 = vrot.lane.b32.xlu0 %v152, 68
  %v294 = vpop.permute.xlu0 %293
  %295 = vrot.lane.b32.xlu0 %v153, 68
  %v296 = vpop.permute.xlu0 %295
  %297 = vrot.lane.b32.xlu0 %v154, 68
  %v298 = vpop.permute.xlu0 %297
  %299 = vrot.lane.b32.xlu0 %v155, 68
  %v300 = vpop.permute.xlu0 %299
  %301 = vrot.lane.b32.xlu0 %v156, 68
  %v302 = vpop.permute.xlu0 %301
  %303 = vrot.lane.b32.xlu0 %v157, 68
  %v304 = vpop.permute.xlu0 %303
  %305 = vrot.lane.b32.xlu0 %v158, 68
  %v306 = vpop.permute.xlu0 %305
  %307 = vrot.lane.b32.xlu0 %v159, 68
  %v308 = vpop.permute.xlu0 %307
  %309 = vrot.lane.b32.xlu0 %v160, 68
  %v310 = vpop.permute.xlu0 %309
  %311 = vrot.lane.b32.xlu0 %v161, 68
  %v312 = vpop.permute.xlu0 %311
  %313 = vrot.lane.b32.xlu0 %v162, 68
  %v314 = vpop.permute.xlu0 %313
  %315 = vrot.lane.b32.xlu0 %v163, 68
  %v316 = vpop.permute.xlu0 %315
  %317 = vrot.lane.b32.xlu0 %v164, 68
  %v318 = vpop.permute.xlu0 %317
  %319 = vrot.lane.b32.xlu0 %v165, 68
  %v320 = vpop.permute.xlu0 %319
  %321 = vrot.lane.b32.xlu0 %v166, 68
  %v322 = vpop.permute.xlu0 %321
  %323 = vrot.lane.b32.xlu0 %v167, 68
  %v324 = vpop.permute.xlu0 %323
  %325 = vrot.lane.b32.xlu0 %v168, 68
  %v326 = vpop.permute.xlu0 %325
  %327 = vrot.lane.b32.xlu0 %v169, 68
  %v328 = vpop.permute.xlu0 %327
  %329 = vrot.lane.b32.xlu0 %v170, 68
  %v330 = vpop.permute.xlu0 %329
  %331 = vrot.lane.b32.xlu0 %v171, 68
  %v332 = vpop.permute.xlu0 %331
  %333 = vrot.lane.b32.xlu0 %v172, 68
  %v334 = vpop.permute.xlu0 %333
  %335 = vrot.lane.b32.xlu0 %v173, 68
  %v336 = vpop.permute.xlu0 %335
  %337 = vrot.lane.b32.xlu0 %v174, 68
  %v338 = vpop.permute.xlu0 %337
  %339 = vrot.lane.b32.xlu0 %v175, 68
  %v340 = vpop.permute.xlu0 %339
  %341 = vrot.lane.b32.xlu0 %v176, 68
  %v342 = vpop.permute.xlu0 %341
  %343 = vrot.lane.b32.xlu0 %v177, 68
  %v344 = vpop.permute.xlu0 %343
  %345 = vrot.lane.b32.xlu0 %v178, 68
  %v346 = vpop.permute.xlu0 %345
  %347 = vrot.lane.b32.xlu0 %v179, 68
  %v348 = vpop.permute.xlu0 %347
  %349 = vrot.lane.b32.xlu0 %v180, 68
  %v350 = vpop.permute.xlu0 %349
  %351 = vrot.lane.b32.xlu0 %v181, 68
  %v352 = vpop.permute.xlu0 %351
  %353 = vrot.lane.b32.xlu0 %v182, 68
  %v354 = vpop.permute.xlu0 %353
  %355 = vrot.lane.b32.xlu0 %v183, 68
  %v356 = vpop.permute.xlu0 %355
  %357 = vrot.lane.b32.xlu0 %v184, 68
  %v358 = vpop.permute.xlu0 %357
  %359 = vrot.lane.b32.xlu0 %v185, 68
  %v360 = vpop.permute.xlu0 %359
  %361 = vrot.lane.b32.xlu0 %v186, 68
  %v362 = vpop.permute.xlu0 %361
  %363 = vrot.lane.b32.xlu0 %v187, 68
  %v364 = vpop.permute.xlu0 %363
  %365 = vrot.lane.b32.xlu0 %v188, 68
  %v366 = vpop.permute.xlu0 %365
  %367 = vrot.lane.b32.xlu0 %v189, 68
  %v368 = vpop.permute.xlu0 %367
  %369 = vrot.lane.b32.xlu0 %v190, 68
  %v370 = vpop.permute.xlu0 %369
  %371 = vrot.lane.b32.xlu0 %v191, 68
  %v372 = vpop.permute.xlu0 %371
  %373 = vrot.lane.b32.xlu0 %v192, 68
  %v374 = vpop.permute.xlu0 %373
  %375 = vrot.lane.b32.xlu0 %v193, 68
  %v376 = vpop.permute.xlu0 %375
  %377 = vrot.lane.b32.xlu0 %v194, 68
  %v378 = vpop.permute.xlu0 %377
  %379 = vrot.lane.b32.xlu0 %v195, 68
  %v380 = vpop.permute.xlu0 %379
  %381 = vrot.lane.b32.xlu0 %v196, 68
  %v382 = vpop.permute.xlu0 %381
  %v383 = vsel %vm71, %v260, %v262
  %v384 = vsel %vm71, %v264, %v266
  %v385 = vsel %vm71, %v268, %v270
  %v386 = vsel %vm71, %v272, %v274
  %v387 = vsel %vm71, %v276, %v278
  %v388 = vsel %vm71, %v280, %v282
  %v389 = vsel %vm71, %v284, %v286
  %v390 = vsel %vm71, %v288, %v290
  %v391 = vsel %vm71, %v292, %v294
  %v392 = vsel %vm71, %v296, %v298
  %v393 = vsel %vm71, %v300, %v302
  %v394 = vsel %vm71, %v304, %v306
  %v395 = vsel %vm71, %v308, %v310
  %v396 = vsel %vm71, %v312, %v314
  %v397 = vsel %vm71, %v316, %v318
  %v398 = vsel %vm71, %v320, %v322
  %v399 = vsel %vm71, %v324, %v326
  %v400 = vsel %vm71, %v328, %v330
  %v401 = vsel %vm71, %v332, %v334
  %v402 = vsel %vm71, %v336, %v338
  %v403 = vsel %vm71, %v340, %v342
  %v404 = vsel %vm71, %v344, %v346
  %v405 = vsel %vm71, %v348, %v350
  %v406 = vsel %vm71, %v352, %v354
  %v407 = vsel %vm71, %v356, %v358
  %v408 = vsel %vm71, %v360, %v362
  %v409 = vsel %vm71, %v364, %v366
  %v410 = vsel %vm71, %v368, %v370
  %v411 = vsel %vm71, %v372, %v374
  %v412 = vsel %vm71, %v376, %v378
  %v413 = vsel %vm71, %v380, %v382
  %vm507 = vcmask 1048096
  %508 = vst.msk [vmem:[%s1 + $0x8] sm:$0xff] %vm507, %v260
  %509 = vst [vmem:[%s1 + $0x10] sm:$0xff] %v383
  %vm510 = vcmask 64512
  %511 = vst.msk [vmem:[%s1 + $0x18] sm:$0xff] %vm510, %v262
  %512 = vst.msk [vmem:[%s1 + $0x28] sm:$0xff] %vm507, %v264
  %513 = vst [vmem:[%s1 + $0x30] sm:$0xff] %v384
  %514 = vst.msk [vmem:[%s1 + $0x38] sm:$0xff] %vm510, %v266
  %515 = vst.msk [vmem:[%s1 + $0x48] sm:$0xff] %vm507, %v268
  %516 = vst [vmem:[%s1 + $0x50] sm:$0xff] %v385
  %517 = vst.msk [vmem:[%s1 + $0x58] sm:$0xff] %vm510, %v270
  %518 = vst.msk [vmem:[%s1 + $0x68] sm:$0xff] %vm507, %v272
  %519 = vst [vmem:[%s1 + $0x70] sm:$0xff] %v386
  %520 = vst.msk [vmem:[%s1 + $0x78] sm:$0xff] %vm510, %v274
  %521 = vst.msk [vmem:[%s1 + $0x88] sm:$0xff] %vm507, %v276
  %522 = vst [vmem:[%s1 + $0x90] sm:$0xff] %v387
  %523 = vst.msk [vmem:[%s1 + $0x98] sm:$0xff] %vm510, %v278
  %524 = vst.msk [vmem:[%s1 + $0xa8] sm:$0xff] %vm507, %v280
  %525 = vst [vmem:[%s1 + $0xb0] sm:$0xff] %v388
  %526 = vst.msk [vmem:[%s1 + $0xb8] sm:$0xff] %vm510, %v282
  %527 = vst.msk [vmem:[%s1 + $0xc8] sm:$0xff] %vm507, %v284
  %528 = vst [vmem:[%s1 + $0xd0] sm:$0xff] %v389
  %529 = vst.msk [vmem:[%s1 + $0xd8] sm:$0xff] %vm510, %v286
  %530 = vst.msk [vmem:[%s1 + $0xe8] sm:$0xff] %vm507, %v288
  %531 = vst [vmem:[%s1 + $0xf0] sm:$0xff] %v390
  %532 = vst.msk [vmem:[%s1 + $0xf8] sm:$0xff] %vm510, %v290
  %533 = vst.msk [vmem:[%s1 + $0x108] sm:$0xff] %vm507, %v292
  %534 = vst [vmem:[%s1 + $0x110] sm:$0xff] %v391
  %535 = vst.msk [vmem:[%s1 + $0x118] sm:$0xff] %vm510, %v294
  %536 = vst.msk [vmem:[%s1 + $0x128] sm:$0xff] %vm507, %v296
  %537 = vst [vmem:[%s1 + $0x130] sm:$0xff] %v392
  %538 = vst.msk [vmem:[%s1 + $0x138] sm:$0xff] %vm510, %v298
  %539 = vst.msk [vmem:[%s1 + $0x148] sm:$0xff] %vm507, %v300
  %540 = vst [vmem:[%s1 + $0x150] sm:$0xff] %v393
  %541 = vst.msk [vmem:[%s1 + $0x158] sm:$0xff] %vm510, %v302
  %542 = vst.msk [vmem:[%s1 + $0x168] sm:$0xff] %vm507, %v304
  %543 = vst [vmem:[%s1 + $0x170] sm:$0xff] %v394
  %544 = vst.msk [vmem:[%s1 + $0x178] sm:$0xff] %vm510, %v306
  %545 = vst.msk [vmem:[%s1 + $0x188] sm:$0xff] %vm507, %v308
  %546 = vst [vmem:[%s1 + $0x190] sm:$0xff] %v395
  %547 = vst.msk [vmem:[%s1 + $0x198] sm:$0xff] %vm510, %v310
  %548 = vst.msk [vmem:[%s1 + $0x1a8] sm:$0xff] %vm507, %v312
  %549 = vst [vmem:[%s1 + $0x1b0] sm:$0xff] %v396
  %550 = vst.msk [vmem:[%s1 + $0x1b8] sm:$0xff] %vm510, %v314
  %551 = vst.msk [vmem:[%s1 + $0x1c8] sm:$0xff] %vm507, %v316
  %552 = vst [vmem:[%s1 + $0x1d0] sm:$0xff] %v397
  %553 = vst.msk [vmem:[%s1 + $0x1d8] sm:$0xff] %vm510, %v318
  %554 = vst.msk [vmem:[%s1 + $0x1e8] sm:$0xff] %vm507, %v320
  %555 = vst [vmem:[%s1 + $0x1f0] sm:$0xff] %v398
  %556 = vst.msk [vmem:[%s1 + $0x1f8] sm:$0xff] %vm510, %v322
  %557 = vst.msk [vmem:[%s1 + $0x208] sm:$0xff] %vm507, %v324
  %558 = vst [vmem:[%s1 + $0x210] sm:$0xff] %v399
  %559 = vst.msk [vmem:[%s1 + $0x218] sm:$0xff] %vm510, %v326
  %560 = vst.msk [vmem:[%s1 + $0x228] sm:$0xff] %vm507, %v328
  %561 = vst [vmem:[%s1 + $0x230] sm:$0xff] %v400
  %562 = vst.msk [vmem:[%s1 + $0x238] sm:$0xff] %vm510, %v330
  %563 = vst.msk [vmem:[%s1 + $0x248] sm:$0xff] %vm507, %v332
  %564 = vst [vmem:[%s1 + $0x250] sm:$0xff] %v401
  %565 = vst.msk [vmem:[%s1 + $0x258] sm:$0xff] %vm510, %v334
  %566 = vst.msk [vmem:[%s1 + $0x268] sm:$0xff] %vm507, %v336
  %567 = vst [vmem:[%s1 + $0x270] sm:$0xff] %v402
  %568 = vst.msk [vmem:[%s1 + $0x278] sm:$0xff] %vm510, %v338
  %569 = vst.msk [vmem:[%s1 + $0x288] sm:$0xff] %vm507, %v340
  %570 = vst [vmem:[%s1 + $0x290] sm:$0xff] %v403
  %571 = vst.msk [vmem:[%s1 + $0x298] sm:$0xff] %vm510, %v342
  %572 = vst.msk [vmem:[%s1 + $0x2a8] sm:$0xff] %vm507, %v344
  %573 = vst [vmem:[%s1 + $0x2b0] sm:$0xff] %v404
  %574 = vst.msk [vmem:[%s1 + $0x2b8] sm:$0xff] %vm510, %v346
  %575 = vst.msk [vmem:[%s1 + $0x2c8] sm:$0xff] %vm507, %v348
  %576 = vst [vmem:[%s1 + $0x2d0] sm:$0xff] %v405
  %577 = vst.msk [vmem:[%s1 + $0x2d8] sm:$0xff] %vm510, %v350
  %578 = vst.msk [vmem:[%s1 + $0x2e8] sm:$0xff] %vm507, %v352
  %579 = vst [vmem:[%s1 + $0x2f0] sm:$0xff] %v406
  %580 = vst.msk [vmem:[%s1 + $0x2f8] sm:$0xff] %vm510, %v354
  %581 = vst.msk [vmem:[%s1 + $0x308] sm:$0xff] %vm507, %v356
  %582 = vst [vmem:[%s1 + $0x310] sm:$0xff] %v407
  %583 = vst.msk [vmem:[%s1 + $0x318] sm:$0xff] %vm510, %v358
  %584 = vst.msk [vmem:[%s1 + $0x328] sm:$0xff] %vm507, %v360
  %585 = vst [vmem:[%s1 + $0x330] sm:$0xff] %v408
  %586 = vst.msk [vmem:[%s1 + $0x338] sm:$0xff] %vm510, %v362
  %587 = vst.msk [vmem:[%s1 + $0x348] sm:$0xff] %vm507, %v364
  %588 = vst [vmem:[%s1 + $0x350] sm:$0xff] %v409
  %589 = vst.msk [vmem:[%s1 + $0x358] sm:$0xff] %vm510, %v366
  %590 = vst.msk [vmem:[%s1 + $0x368] sm:$0xff] %vm507, %v368
  %591 = vst [vmem:[%s1 + $0x370] sm:$0xff] %v410
  %592 = vst.msk [vmem:[%s1 + $0x378] sm:$0xff] %vm510, %v370
  %593 = vst.msk [vmem:[%s1 + $0x388] sm:$0xff] %vm507, %v372
  %594 = vst [vmem:[%s1 + $0x390] sm:$0xff] %v411
  %595 = vst.msk [vmem:[%s1 + $0x398] sm:$0xff] %vm510, %v374
  %596 = vst.msk [vmem:[%s1 + $0x3a8] sm:$0xff] %vm507, %v376
  %597 = vst [vmem:[%s1 + $0x3b0] sm:$0xff] %v412
  %598 = vst.msk [vmem:[%s1 + $0x3b8] sm:$0xff] %vm510, %v378
  %vm599 = vcmask 1044000
  %600 = vst.msk [vmem:[%s1 + $0x3c8] sm:$0xf] %vm599, %v380
  %601 = vst [vmem:[%s1 + $0x3d0] sm:$0xf] %v413
  %vm602 = vcmask 60416
  %603 = vst.msk [vmem:[%s1 + $0x3d8] sm:$0xf] %vm602, %v382
  // Predicated region
  $region6: #{tpu_custom_call.1} parent=0 // pred_check
    _
  $region7: #{tpu_custom_call.1} parent=0 // pred_check_branch
    %605 = sbr.rel (0) target = $region9
  $region8: #{tpu_custom_call.1} parent=0 // pred_region
    _
  $region9: #{tpu_custom_call.1} parent=0 // pred_fallthru
    _
  // Predicated region
  $region10: #{tpu_custom_call.1} parent=0 // pred_check
    _
  $region11: #{tpu_custom_call.1} parent=0 // pred_check_branch
    %607 = sbr.rel (0) target = $region13
  $region12: #{tpu_custom_call.1} parent=0 // pred_region
    _
  $region13: #{tpu_custom_call.1} parent=0 // pred_fallthru
    _

</llo_original>
